<compile_context>
chip_gen: v7x
topology: tpu7x:2x2x1
jax: 0.10.0
libtpu: 0.0.40
codegen_flags: <defaults>
</compile_context>

<pallas_src>
import math

import jax
import jax.numpy as jnp
from jax.experimental import pallas as pl
from jax.experimental.pallas import tpu as pltpu


def _round_up(x, m):
    return ((x + m - 1) // m) * m


def decoder_forward(x, weight, bias, kernel_size, *, tile_m_target=2048):
    """Equivalent of Decoder.forward.

    x      : (B, C_in, L)        -- PyTorch NCL layout
    weight : (C_in, C_out, K)    -- PyTorch ConvTranspose1d weight layout
    bias   : (C_out,)
    returns: (B, C_out, T),  T = (L - 1) * stride + K
    """
    B, C_in, L = x.shape
    c_in_w, C_out, K = weight.shape
    assert c_in_w == C_in and K == kernel_size
    stride = 1 if kernel_size == 1 else kernel_size // 2
    T = (L - 1) * stride + K

    # Residue-class decomposition:  t = m*stride + r, r in [0, stride).
    #   out[co, m*stride + r] = bias[co] + sum_j P[(j*stride + r)*C_out + co, m - j]
    # with P = W_flat @ x[b], W_flat[k*C_out + co, ci] = weight[ci, co, k],
    # valid only for 0 <= m - j < L.
    n_res = stride
    max_shift = (K - 1) // stride          # largest frame shift j
    L_res = L + max_shift                  # frames per residue class
    H = max(max_shift, 1)                  # halo width (>=1 to avoid 0-size arrays)

    # ---- L-tile sizing ------------------------------------------------------
    # Cap the lane tile so the double-buffered x tile stays <= ~8 MiB
    # (v7x-friendly: 64 MiB physical VMEM, 32 MiB default scoped).
    bytes_per_frame = C_in * jnp.dtype(x.dtype).itemsize
    cap = max(128, (8 * 1024 * 1024 // (2 * bytes_per_frame)) // 128 * 128)
    tile_m = max(128, min(tile_m_target, cap, _round_up(L_res, 128)))
    L_pad = _round_up(L_res, tile_m)       # padded frame extent (multiple of tile_m)
    n_tiles = L_pad // tile_m

    # ---- tiny / padded operands --------------------------------------------
    w_flat = jnp.transpose(weight, (2, 1, 0)).reshape(K * C_out, C_in)
    b_col = bias.reshape(C_out, 1)
    # Main input tiles: zero-pad x on the right to L_pad (frames >= L contribute 0).
    x_main = jnp.pad(x, ((0, 0), (0, 0), (0, L_pad - L)))
    # Input-side halo: last max_shift frames *before* each tile (zeros for tile 0
    # / past the end).  Shape (B, n_tiles, C_in, H) -- negligible extra HBM.
    x_halo_src = jnp.pad(x, ((0, 0), (0, 0), (max_shift, L_pad - L)))
    idx = jnp.arange(n_tiles)[:, None] * tile_m + jnp.arange(H)[None, :]
    halo = jnp.transpose(x_halo_src[:, :, idx], (0, 2, 1, 3))

    def kernel(x_ref, h_ref, w_ref, b_ref, o_ref):
        # x_ref: (1, C_in, tile_m)     h_ref: (1, 1, C_in, H)
        # w_ref: (K*C_out, C_in)       b_ref: (C_out, 1)
        # o_ref: (1, C_out, n_res, tile_m)
        x_t = x_ref[0]                                              # (C_in, tile_m)
        # MXU matmul: contraction depth = C_in, lane axis = tile_m (dense).
        p_main = jnp.dot(w_ref[...], x_t,
                         preferred_element_type=jnp.float32)        # (K*C_out, tile_m)
        if max_shift > 0:
            p_halo = jnp.dot(w_ref[...], h_ref[0, 0],
                             preferred_element_type=jnp.float32)    # (K*C_out, H)
            p_cat = jnp.concatenate([p_halo, p_main], axis=-1)      # (K*C_out, H+tile_m)

        # Value-space overlap-add in f32: tap k lands on residue r = k % stride
        # with frame shift j = k // stride.  Static slices -> XLU lane shifts on
        # the small (K*C_out)-row matrix; accumulation is plain VPU adds.
        acc = [None] * n_res
        for k in range(K):
            r = k % stride
            j = k // stride
            if j == 0:
                contrib = p_main[k * C_out:(k + 1) * C_out, :]
            else:
                s0 = max_shift - j
                contrib = p_cat[k * C_out:(k + 1) * C_out, s0:s0 + tile_m]
            acc[r] = contrib if acc[r] is None else acc[r] + contrib

        full = (jnp.stack(acc, axis=1)
                + b_ref[...].astype(jnp.float32)[:, None, :])        # (C_out, n_res, tile_m)
        # Single unmasked lane-dense store; cast from f32 only here.
        o_ref[0] = full.astype(o_ref.dtype)

    # TODO(synk): if the surrounding model tolerates it, stream x / w_flat as
    # bf16 (keep f32 accumulation) to halve HBM bytes; and on v7x sweep
    # pipeline_mode=pl.Buffered(3) on the x spec once profiles show exposed DMA.
    out_res = pl.pallas_call(
        kernel,
        out_shape=jax.ShapeDtypeStruct((B, C_out, n_res, L_pad), x.dtype),
        grid_spec=pltpu.PrefetchScalarGridSpec(
            num_scalar_prefetch=0,
            grid=(B, n_tiles),
            in_specs=[
                pl.BlockSpec((1, C_in, tile_m), lambda b, t: (b, 0, t)),
                pl.BlockSpec((1, 1, C_in, H), lambda b, t: (b, t, 0, 0)),
                pl.BlockSpec((K * C_out, C_in), lambda b, t: (0, 0)),
                pl.BlockSpec((C_out, 1), lambda b, t: (0, 0)),
            ],
            out_specs=pl.BlockSpec((1, C_out, n_res, tile_m),
                                   lambda b, t: (b, 0, 0, t)),
        ),
        compiler_params=pltpu.CompilerParams(
            dimension_semantics=("parallel", "parallel"),
            vmem_limit_bytes=32 * 1024 * 1024),
    )(x_main, halo, w_flat, b_col)

    # Interleave residue classes back onto the time axis:
    #   out[b, co, m*stride + r] = out_res[b, co, r, m], trimmed to T.
    # (C_out is typically 1, so this is a small fraction of total HBM traffic.)
    out = jnp.transpose(out_res, (0, 1, 3, 2)).reshape(B, C_out, n_res * L_pad)
    return out[:, :, :T]


def _reference_forward(x, weight, bias, kernel_size):
    """Direct-definition ConvTranspose1d reference (plain JAX/XLA)."""
    B, C_in, L = x.shape
    _, C_out, K = weight.shape
    stride = 1 if kernel_size == 1 else kernel_size // 2
    T = (L - 1) * stride + K
    out = jnp.zeros((B, C_out, T), jnp.float32)
    for k in range(K):
        contrib = jnp.einsum('bil,io->bol', x, weight[:, :, k],
                             precision=jax.lax.Precision.HIGHEST)
        out = out.at[:, :, k:k + (L - 1) * stride + 1:stride].add(contrib)
    return out + bias[None, :, None]


def _run_case(key, B, C_in, C_out, K, L, **kw):
    kx, kw_, kb = jax.random.split(key, 3)
    x = jax.random.normal(kx, (B, C_in, L), dtype=jnp.float32)
    bound = 1.0 / math.sqrt(C_in * K)     # ~ nn.ConvTranspose1d default scale
    weight = jax.random.uniform(kw_, (C_in, C_out, K), dtype=jnp.float32,
                                minval=-bound, maxval=bound)
    bias = jax.random.uniform(kb, (C_out,), dtype=jnp.float32,
                              minval=-bound, maxval=bound)

    y = jax.block_until_ready(decoder_forward(x, weight, bias, K, **kw))
    y_ref = _reference_forward(x, weight, bias, K)
    assert y.shape == y_ref.shape, (y.shape, y_ref.shape)
    assert jnp.allclose(y, y_ref, atol=1e-4, rtol=1e-4), \
        f"mismatch vs reference (C_in={C_in}, C_out={C_out}, K={K}, L={L})"


if __name__ == "__main__":
    key = jax.random.PRNGKey(0)
    k1, k2, k3, k4 = jax.random.split(key, 4)
    # Sandglasset-style decoder: feature dim -> 1 waveform channel, K=4, stride=2.
    _run_case(k1, B=2, C_in=32, C_out=1, K=4, L=16)
    # Multi-channel output + odd kernel size (stride = K // 2 = 2).
    _run_case(k2, B=2, C_in=16, C_out=4, K=5, L=12)
    # kernel_size == 1 branch (pointwise, stride = 1).
    _run_case(k3, B=2, C_in=8, C_out=4, K=1, L=16)
    # Multi-L-tile path (forces n_tiles > 1 + halo across tile boundaries).
    _run_case(k4, B=2, C_in=16, C_out=1, K=4, L=300, tile_m_target=128)
    print("KERNEL_OK")
</pallas_src>

<mosaic_0001>
module attributes {stable_mosaic.version = 11 : i64} {
  func.func @kernel(%arg0: i32, %arg1: i32, %arg2: memref<1x32x128xf32, #tpu.memory_space<vmem>>, %arg3: memref<1x1x32x1xf32, #tpu.memory_space<vmem>>, %arg4: memref<4x32xf32, #tpu.memory_space<vmem>>, %arg5: memref<1x1xf32, #tpu.memory_space<vmem>>, %arg6: memref<1x1x2x128xf32, #tpu.memory_space<vmem>>) attributes {dimension_semantics = [#tpu.dimension_semantics<parallel>, #tpu.dimension_semantics<parallel>], iteration_bounds = array<i64: 2, 1>, scalar_prefetch = 0 : i64, scratch_operands = 0 : i64, tpu.core_type = #tpu.core_type<tc>, window_params = [{transform_indices = @transform_0, window_bounds = array<i64: 1, 32, 128>}, {transform_indices = @transform_1, window_bounds = array<i64: 1, 1, 32, 1>}, {pipeline_mode = #tpu.pipeline_mode<synchronous>, transform_indices = @transform_2, window_bounds = array<i64: 4, 32>}, {pipeline_mode = #tpu.pipeline_mode<synchronous>, transform_indices = @transform_3, window_bounds = array<i64: 1, 1>}, {transform_indices = @transform_4, window_bounds = array<i64: 1, 1, 2, 128>}]} {
    %c0 = arith.constant 0 : index
    %c0_0 = arith.constant 0 : index
    %c0_1 = arith.constant 0 : index
    %0 = vector.load %arg2[%c0, %c0_0, %c0_1] : memref<1x32x128xf32, #tpu.memory_space<vmem>>, vector<1x32x128xf32>
    %1 = vector.shape_cast %0 : vector<1x32x128xf32> to vector<32x128xf32>
    %c0_2 = arith.constant 0 : index
    %c0_3 = arith.constant 0 : index
    %2 = vector.load %arg4[%c0_2, %c0_3] : memref<4x32xf32, #tpu.memory_space<vmem>>, vector<4x32xf32>
    %cst = arith.constant dense<0.000000e+00> : vector<4x128xf32>
    %3 = tpu.matmul %2, %1, %cst {dimension_numbers = #tpu.dot_dimension_numbers<[1], [0], [0], [1], [0, 0, 1, 1], [], []>} : vector<4x32xf32>, vector<32x128xf32>, vector<4x128xf32> -> vector<4x128xf32>
    %c0_4 = arith.constant 0 : index
    %c0_5 = arith.constant 0 : index
    %4 = vector.load %arg4[%c0_4, %c0_5] : memref<4x32xf32, #tpu.memory_space<vmem>>, vector<4x32xf32>
    %c0_6 = arith.constant 0 : index
    %c0_7 = arith.constant 0 : index
    %c0_8 = arith.constant 0 : index
    %c0_9 = arith.constant 0 : index
    %5 = vector.load %arg3[%c0_6, %c0_7, %c0_8, %c0_9] : memref<1x1x32x1xf32, #tpu.memory_space<vmem>>, vector<1x1x32x1xf32>
    %6 = vector.shape_cast %5 : vector<1x1x32x1xf32> to vector<32x1xf32>
    %cst_10 = arith.constant dense<0.000000e+00> : vector<4x1xf32>
    %7 = tpu.matmul %4, %6, %cst_10 {dimension_numbers = #tpu.dot_dimension_numbers<[1], [0], [0], [1], [0, 0, 1, 1], [], []>} : vector<4x32xf32>, vector<32x1xf32>, vector<4x1xf32> -> vector<4x1xf32>
    %8 = tpu.concatenate %7, %3 in 1 : vector<4x1xf32>, vector<4x128xf32> -> vector<4x129xf32>
    %9 = vector.extract_strided_slice %3 {offsets = [0, 0], sizes = [1, 128], strides = [1, 1]} : vector<4x128xf32> to vector<1x128xf32>
    %10 = vector.extract_strided_slice %3 {offsets = [1, 0], sizes = [1, 128], strides = [1, 1]} : vector<4x128xf32> to vector<1x128xf32>
    %11 = vector.extract_strided_slice %8 {offsets = [2, 0], sizes = [1, 128], strides = [1, 1]} : vector<4x129xf32> to vector<1x128xf32>
    %12 = arith.addf %9, %11 : vector<1x128xf32>
    %13 = vector.extract_strided_slice %8 {offsets = [3, 0], sizes = [1, 128], strides = [1, 1]} : vector<4x129xf32> to vector<1x128xf32>
    %14 = arith.addf %10, %13 : vector<1x128xf32>
    %15 = vector.shape_cast %12 : vector<1x128xf32> to vector<1x1x128xf32>
    %16 = vector.shape_cast %14 : vector<1x128xf32> to vector<1x1x128xf32>
    %17 = tpu.concatenate %15, %16 in 1 : vector<1x1x128xf32>, vector<1x1x128xf32> -> vector<1x2x128xf32>
    %c0_11 = arith.constant 0 : index
    %c0_12 = arith.constant 0 : index
    %18 = vector.load %arg5[%c0_11, %c0_12] : memref<1x1xf32, #tpu.memory_space<vmem>>, vector<1x1xf32>
    %19 = vector.shape_cast %18 : vector<1x1xf32> to vector<1x1x1xf32>
    %20 = vector.broadcast %19 : vector<1x1x1xf32> to vector<1x2x128xf32>
    %21 = arith.addf %17, %20 : vector<1x2x128xf32>
    %c0_13 = arith.constant 0 : index
    %c0_14 = arith.constant 0 : index
    %c0_15 = arith.constant 0 : index
    %c0_16 = arith.constant 0 : index
    %22 = vector.load %arg6[%c0_13, %c0_14, %c0_15, %c0_16] : memref<1x1x2x128xf32, #tpu.memory_space<vmem>>, vector<1x1x2x128xf32>
    %23 = vector.shape_cast %22 : vector<1x1x2x128xf32> to vector<1x2x128xf32>
    %24 = vector.shape_cast %21 : vector<1x2x128xf32> to vector<1x1x2x128xf32>
    tpu.vector_store %arg6[%c0_13, %c0_14, %c0_15, %c0_16], %24 {strides = array<i32>} : memref<1x1x2x128xf32, #tpu.memory_space<vmem>>, vector<1x1x2x128xf32>,
    return
  }
  func.func @transform_0(%arg0: i32, %arg1: i32) -> (i32, i32, i32) {
    %c0_i32 = arith.constant 0 : i32
    %c0_i32_0 = arith.constant 0 : i32
    return %arg0, %c0_i32, %arg1 : i32, i32, i32
  }
  func.func @transform_1(%arg0: i32, %arg1: i32) -> (i32, i32, i32, i32) {
    %c0_i32 = arith.constant 0 : i32
    %c0_i32_0 = arith.constant 0 : i32
    %c0_i32_1 = arith.constant 0 : i32
    return %arg0, %arg1, %c0_i32, %c0_i32_0 : i32, i32, i32, i32
  }
  func.func @transform_2(%arg0: i32, %arg1: i32) -> (i32, i32) {
    %c0_i32 = arith.constant 0 : i32
    %c0_i32_0 = arith.constant 0 : i32
    %c0_i32_1 = arith.constant 0 : i32
    return %c0_i32, %c0_i32_0 : i32, i32
  }
  func.func @transform_3(%arg0: i32, %arg1: i32) -> (i32, i32) {
    %c0_i32 = arith.constant 0 : i32
    %c0_i32_0 = arith.constant 0 : i32
    %c0_i32_1 = arith.constant 0 : i32
    return %c0_i32, %c0_i32_0 : i32, i32
  }
  func.func @transform_4(%arg0: i32, %arg1: i32) -> (i32, i32, i32, i32) {
    %c0_i32 = arith.constant 0 : i32
    %c0_i32_0 = arith.constant 0 : i32
    %c0_i32_1 = arith.constant 0 : i32
    return %arg0, %c0_i32, %c0_i32_0, %arg1 : i32, i32, i32, i32
  }
}

</mosaic_0001>

<llo_original>
// kernel: tpu_custom_call.1
$region0: #{tpu_custom_call.1}
  #allocation0 [shape = 'u32[]', space=smem, size = 0x4, offset = 0x4, fixed_abs, tag = 'smem constant byte address 0x4 - core index']
  #allocation1 [shape = 'u32[144,128]{1,0:T(1,128)}', space=vmem, size = 0x12000, scoped, tag = 'internal scratch']
  #allocation2 [shape = 'f32[1,1]{1,0:T(1,128)S(1)}', space=vmem, size = 0x200, scoped, tag = 'scoped memory for tpu_custom_call.1']
  %s0 = inlined_call_operand.vmem [shape: f32[2,32,128], index: 0, kind: input, shape index: {}]
  %s1 = inlined_call_operand.vmem [shape: f32[2,1,32,1], index: 1, kind: input, shape index: {}]
  %s2 = inlined_call_operand.vmem [shape: f32[4,32], index: 2, kind: input, shape index: {}]
  %s3 = inlined_call_operand.<no memory space> [shape: f32[1,1], index: 3, kind: input, shape index: {}]
  %s4 = inlined_call_operand.hbm [shape: f32[2,1,2,128], index: 4, kind: output, shape index: {}]
  %s5 = sld [smem:[#allocation0]]
  $region49: #{tpu_custom_call.1} parent=0
    _
  %s7 = ssub.s32 1, %s5
  %s8 = scalar_select 0, %s7, %s5
  %v9 = vstv %s3
  %10 = vst [vmem:[#allocation2] sm:$0x1] %v9
  $region1: #{tpu_custom_call.1} parent=0
    #allocation3 [shape = 'u8[2048]{0}', space=vmem, size = 0x800, scoped, tag = 'output window, operand 0']
    #allocation4 [shape = 's32[2]{0}', space=sflag, size = 0x8, scoped, tag = 'scoped memory for tpu_custom_call.1']
    %11 = vsyncpa [#allocation4], 0
    %s12 = scalar_lea.sflag [#allocation4], 1
    %13 = vsyncpa %s12, 0
    loop: start=0, step=1, limit=4
    $region2: #{tpu_custom_call.1} parent=1 // loop_pre_header
      _
    $region3: #{tpu_custom_call.1} parent=1 // loop_header
      %s15 = sphi 0, %s19
      %p16 = scmp.ge.s32.totalorder %s15, 4
      %s22 = sphi 0, %s34
      %s23 = sphi 0, %s30
      %s24 = sphi 0, %s22
      %s25 = sphi 0, %s23
      %s26 = sphi 0, %s24
      %s27 = sphi 0, %s25
      %s39 = sphi 0, %s41
      %s42 = sphi 0, %s39
      %s43 = sphi 0, %s42
      %s59 = sphi 0, %s43
      %s67 = sphi 0, %s69
      %s70 = sphi 0, %s67
      %s71 = sphi 0, %s70
      %s87 = sphi 0, %s71
      %s91 = sphi 0, %s91
      %s93 = sphi 0, %s91
      %s94 = sphi 0, %s93
      %s108 = sphi 0, %s94
      %s112 = sphi 0, %s112
      %s114 = sphi 0, %s112
      %s115 = sphi 0, %s114
      %s129 = sphi 0, %s115
      %s137 = sphi 0, %s139
      %s140 = sphi 0, %s137
      %s141 = sphi 0, %s140
      %s157 = sphi 0, %s141
    $region4: #{tpu_custom_call.1} parent=1 // loop_header_branch
      %18 = sbr.rel (%p16) target = $region8
    $region5: #{tpu_custom_call.1} parent=1 // loop_body
      %s20 = ssub.s32 %s15, 1
      %s21 = ssub.s32 %s15, 2
      %s28 = sadd.s32 1, %s23
      %p29 = scmp.ge.s32.totalorder %s28, 1
      %s30 = scalar_select %p29, 0, %s28
      %s31 = sadd.s32 1, %s22
      %s32 = scalar_select %p29, %s31, %s22
      %p33 = scmp.ge.s32.totalorder %s32, 2
      %s34 = scalar_select %p33, 0, %s32
      %s35 = ssub.s32 %s22, %s34
      %s36 = ssub.s32 %s23, %s30
      %s37 = sor.u32 %s35, %s36
      %p38 = scmp.eq.s32.totalorder %s37, 0
      %s40 = sadd.s32 %s39, 1
      %s41 = scalar_select %p38, %s39, %s40
      %p44 = pneg %p38
      %p45 = scmp.eq.s32.totalorder %s15, 1
      %p46 = por %p44, %p45
      %p47 = scmp.ne.s32.totalorder %s39, %s42
      %p48 = scmp.eq.s32.totalorder %s15, 0
      %p49 = por %p47, %p48
      %p50 = scmp.ne.s32.totalorder %s39, %s42
      %p51 = scmp.eq.s32.totalorder %s20, 1
      %p52 = por %p50, %p51
      %p53 = scmp.ne.s32.totalorder %s42, %s43
      %p54 = scmp.eq.s32.totalorder %s20, 0
      %p55 = por %p53, %p54
      %p56 = scmp.ne.s32.totalorder %s42, %s43
      %p57 = scmp.eq.s32.totalorder %s21, 1
      %p58 = por %p56, %p57
      %p60 = scmp.ne.s32.totalorder %s43, %s59
      %p61 = scmp.eq.s32.totalorder %s21, 0
      %p62 = por %p60, %p61
      %s63 = ssub.s32 %s22, %s34
      %s64 = ssub.s32 %s23, %s30
      %s65 = sor.u32 %s63, %s64
      %p66 = scmp.eq.s32.totalorder %s65, 0
      %s68 = sadd.s32 %s67, 1
      %s69 = scalar_select %p66, %s67, %s68
      %p72 = pneg %p66
      %p73 = scmp.eq.s32.totalorder %s15, 1
      %p74 = por %p72, %p73
      %p75 = scmp.ne.s32.totalorder %s67, %s70
      %p76 = scmp.eq.s32.totalorder %s15, 0
      %p77 = por %p75, %p76
      %p78 = scmp.ne.s32.totalorder %s67, %s70
      %p79 = scmp.eq.s32.totalorder %s20, 1
      %p80 = por %p78, %p79
      %p81 = scmp.ne.s32.totalorder %s70, %s71
      %p82 = scmp.eq.s32.totalorder %s20, 0
      %p83 = por %p81, %p82
      %p84 = scmp.ne.s32.totalorder %s70, %s71
      %p85 = scmp.eq.s32.totalorder %s21, 1
      %p86 = por %p84, %p85
      %p88 = scmp.ne.s32.totalorder %s71, %s87
      %p89 = scmp.eq.s32.totalorder %s21, 0
      %p90 = por %p88, %p89
      %s92 = sadd.s32 %s91, 1
      %p95 = scmp.eq.s32.totalorder %s15, 1
      %p96 = scmp.ne.s32.totalorder %s91, %s93
      %p97 = scmp.eq.s32.totalorder %s15, 0
      %p98 = por %p96, %p97
      %p99 = scmp.ne.s32.totalorder %s91, %s93
      %p100 = scmp.eq.s32.totalorder %s20, 1
      %p101 = por %p99, %p100
      %p102 = scmp.ne.s32.totalorder %s93, %s94
      %p103 = scmp.eq.s32.totalorder %s20, 0
      %p104 = por %p102, %p103
      %p105 = scmp.ne.s32.totalorder %s93, %s94
      %p106 = scmp.eq.s32.totalorder %s21, 1
      %p107 = por %p105, %p106
      %p109 = scmp.ne.s32.totalorder %s94, %s108
      %p110 = scmp.eq.s32.totalorder %s21, 0
      %p111 = por %p109, %p110
      %s113 = sadd.s32 %s112, 1
      %p116 = scmp.eq.s32.totalorder %s15, 1
      %p117 = scmp.ne.s32.totalorder %s112, %s114
      %p118 = scmp.eq.s32.totalorder %s15, 0
      %p119 = por %p117, %p118
      %p120 = scmp.ne.s32.totalorder %s112, %s114
      %p121 = scmp.eq.s32.totalorder %s20, 1
      %p122 = por %p120, %p121
      %p123 = scmp.ne.s32.totalorder %s114, %s115
      %p124 = scmp.eq.s32.totalorder %s20, 0
      %p125 = por %p123, %p124
      %p126 = scmp.ne.s32.totalorder %s114, %s115
      %p127 = scmp.eq.s32.totalorder %s21, 1
      %p128 = por %p126, %p127
      %p130 = scmp.ne.s32.totalorder %s115, %s129
      %p131 = scmp.eq.s32.totalorder %s21, 0
      %p132 = por %p130, %p131
      %s133 = ssub.s32 %s22, %s34
      %s134 = ssub.s32 %s23, %s30
      %s135 = sor.u32 %s133, %s134
      %p136 = scmp.eq.s32.totalorder %s135, 0
      %s138 = sadd.s32 %s137, 1
      %s139 = scalar_select %p136, %s137, %s138
      %p142 = pneg %p136
      %p143 = scmp.eq.s32.totalorder %s15, 1
      %p144 = por %p142, %p143
      %p145 = scmp.ne.s32.totalorder %s137, %s140
      %p146 = scmp.eq.s32.totalorder %s15, 0
      %p147 = por %p145, %p146
      %p148 = scmp.ne.s32.totalorder %s137, %s140
      %p149 = scmp.eq.s32.totalorder %s20, 1
      %p150 = por %p148, %p149
      %p151 = scmp.ne.s32.totalorder %s140, %s141
      %p152 = scmp.eq.s32.totalorder %s20, 0
      %p153 = por %p151, %p152
      %p154 = scmp.ne.s32.totalorder %s140, %s141
      %p155 = scmp.eq.s32.totalorder %s21, 1
      %p156 = por %p154, %p155
      %p158 = scmp.ne.s32.totalorder %s141, %s157
      %p159 = scmp.eq.s32.totalorder %s21, 0
      %p160 = por %p158, %p159
      %p161 = scmp.le.s32.totalorder 1, %s15
      %p162 = scmp.lt.s32.totalorder %s15, 3
      %p163 = pnand %p161, %p162
      %p164 = pneg %p163
      // Predicated region
      $region9: #{tpu_custom_call.1} parent=5 // pred_check
        _
      $region10: #{tpu_custom_call.1} parent=5 // pred_check_branch
        %166 = sbr.rel (%p163) target = $region12
      $region11: #{tpu_custom_call.1} parent=5 // pred_region
        %s167 = ssub.s32 %s15, 1
        // Predicated region
        $region13: #{tpu_custom_call.1} parent=11 // pred_check
          %p168 = pneg %p104
        $region14: #{tpu_custom_call.1} parent=11 // pred_check_branch
          %170 = sbr.rel (%p168) target = $region16
        $region15: #{tpu_custom_call.1} parent=11 // pred_region
          _
        $region16: #{tpu_custom_call.1} parent=11 // pred_fallthru
          _
        // Predicated region
        $region17: #{tpu_custom_call.1} parent=11 // pred_check
          %p171 = pneg %p125
        $region18: #{tpu_custom_call.1} parent=11 // pred_check_branch
          %173 = sbr.rel (%p171) target = $region20
        $region19: #{tpu_custom_call.1} parent=11 // pred_region
          _
        $region20: #{tpu_custom_call.1} parent=11 // pred_fallthru
          _
      $region12: #{tpu_custom_call.1} parent=5 // pred_fallthru
        _
      %p174 = scmp.lt.s32.totalorder %s15, 2
      // Predicated region
      $region21: #{tpu_custom_call.1} parent=5 // pred_check
        %p175 = pneg %p174
      $region22: #{tpu_custom_call.1} parent=5 // pred_check_branch
        %177 = sbr.rel (%p175) target = $region24
      $region23: #{tpu_custom_call.1} parent=5 // pred_region
        // Predicated region
        $region25: #{tpu_custom_call.1} parent=23 // pred_check
          %p178 = pneg %p49
        $region26: #{tpu_custom_call.1} parent=23 // pred_check_branch
          %180 = sbr.rel (%p178) target = $region28
        $region27: #{tpu_custom_call.1} parent=23 // pred_region
          %p181 = scmp.lt.s32.totalorder %s22, 1
          %s182 = scalar_select %p181, %s22, 1
          %p183 = scmp.lt.s32.totalorder %s23, 0
          %s184 = scalar_select %p183, %s23, 0
          %s185 = smul.addr %s182, 4
          %s186 = sadd.s32 %s184, %s185
          %s187 = smul.addr %s186, 8
          %s188 = scalar_lea.vmem %s0, %s187
        $region28: #{tpu_custom_call.1} parent=23 // pred_fallthru
          _
        // Predicated region
        $region29: #{tpu_custom_call.1} parent=23 // pred_check
          %p189 = pneg %p77
        $region30: #{tpu_custom_call.1} parent=23 // pred_check_branch
          %191 = sbr.rel (%p189) target = $region32
        $region31: #{tpu_custom_call.1} parent=23 // pred_region
          %p192 = scmp.lt.s32.totalorder %s22, 1
          %s193 = scalar_select %p192, %s22, 1
          %p194 = scmp.lt.s32.totalorder %s23, 0
          %s195 = scalar_select %p194, %s23, 0
          %s196 = smul.addr %s195, 4
          %s197 = smul.addr %s193, 4
          %s198 = sadd.s32 %s196, %s197
          %s199 = smul.addr %s198, 8
          %s200 = scalar_lea.vmem %s1, %s199
        $region32: #{tpu_custom_call.1} parent=23 // pred_fallthru
          _
      $region24: #{tpu_custom_call.1} parent=5 // pred_fallthru
        _
      %p201 = scmp.le.s32.totalorder 1, %s15
      %p202 = scmp.lt.s32.totalorder %s15, 3
      %p203 = pnand %p201, %p202
      %p204 = pneg %p203
      // Predicated region
      $region33: #{tpu_custom_call.1} parent=5 // pred_check
        _
      $region34: #{tpu_custom_call.1} parent=5 // pred_check_branch
        %206 = sbr.rel (%p203) target = $region36
      $region35: #{tpu_custom_call.1} parent=5 // pred_region
        %s207 = ssub.s32 %s15, 1
        %p208 = scmp.lt.s32.totalorder %s24, 1
        %s209 = scalar_select %p208, %s24, 1
        %p210 = scmp.lt.s32.totalorder %s25, 0
        %s211 = scalar_select %p210, %s25, 0
        %s212 = smul.addr %s209, 4
        %s213 = sadd.s32 %s211, %s212
        %s214 = smul.addr %s213, 8
        %s215 = scalar_lea.vmem %s0, %s214
        %p216 = pneg %p55
        %p217 = pneg %p52
        %p218 = scmp.lt.s32.totalorder %s24, 1
        %s219 = scalar_select %p218, %s24, 1
        %p220 = scmp.lt.s32.totalorder %s25, 0
        %s221 = scalar_select %p220, %s25, 0
        %s222 = smul.addr %s221, 4
        %s223 = smul.addr %s219, 4
        %s224 = sadd.s32 %s222, %s223
        %s225 = smul.addr %s224, 8
        %s226 = scalar_lea.vmem %s1, %s225
        %p227 = pneg %p83
        %p228 = pneg %p80
        %p229 = pneg %p104
        %p230 = pneg %p101
        %p231 = pneg %p125
        %p232 = pneg %p122
        %p233 = pneg %p153
        %p234 = pneg %p150
        %s235 = sand.u32 %s140, 1
        %s236 = scalar_lea.sflag [#allocation4], %s235
        %s237 = sand.u32 %s140, 1
        %s238 = smul.addr %s237, 2
        %s239 = scalar_lea.vmem [#allocation3], %s238
        %p240 = scmp.lt.s32.totalorder %s24, 1
        %s241 = scalar_select %p240, %s24, 1
        %p242 = scmp.lt.s32.totalorder %s25, 0
        %s243 = scalar_select %p242, %s25, 0
        %s244 = smul.addr %s241, 4
        %s245 = sadd.s32 %s243, %s244
        %s246 = smul.addr %s245, 8
        %s247 = scalar_lea.vmem %s0, %s246
        %p248 = scmp.lt.s32.totalorder %s24, 1
        %s249 = scalar_select %p248, %s24, 1
        %p250 = scmp.lt.s32.totalorder %s25, 0
        %s251 = scalar_select %p250, %s25, 0
        %s252 = smul.addr %s251, 4
        %s253 = smul.addr %s249, 4
        %s254 = sadd.s32 %s252, %s253
        %s255 = smul.addr %s254, 8
        %s256 = scalar_lea.vmem %s1, %s255
        %v257 = vld [vmem:[%s247] sm:$0xff]
        %v258 = vld [vmem:[%s247 + $0x8] sm:$0xff]
        %v259 = vld [vmem:[%s247 + $0x10] sm:$0xff]
        %v260 = vld [vmem:[%s247 + $0x18] sm:$0xff]
        %v261 = vld [vmem:[%s2] sm:$0xf]
        %vm262 = vcmask 261120
        %v264 = vsel %vm262, %v261, 0
        %266 = vmatprep.subr.mxu0 0.0
        %267 = vmatpush1.msra.mxu0 %v257
        %268 = vmatprep.subr.mxu0 0.0
        %269 = vmatpush1.msra.mxu0 %v258
        %270 = vmatprep.subr.mxu0 0.0
        %271 = vmatpush1.msra.mxu0 %v259
        %272 = vmatprep.subr.mxu0 0.0
        %273 = vmatpush1.msra.mxu0 %v260
        %274 = vmatprep.subr.mxu0 0.0
        %275 = vmatpush1.msra.mxu0 0.0
        %276 = vmatprep.subr.mxu0 0.0
        %277 = vmatpush1.msra.mxu0 0.0
        %278 = vmatprep.subr.mxu0 0.0
        %279 = vmatpush1.msra.mxu0 0.0
        %280 = vmatprep.subr.mxu0 0.0
        %281 = vmatpush1.msra.mxu0 0.0
        %282 = vmatprep.subr.mxu0 0.0
        %283 = vmatpush1.msra.mxu0 0.0
        %284 = vmatprep.subr.mxu0 0.0
        %285 = vmatpush1.msra.mxu0 0.0
        %286 = vmatprep.subr.mxu0 0.0
        %287 = vmatpush1.msra.mxu0 0.0
        %288 = vmatprep.subr.mxu0 0.0
        %289 = vmatpush1.msra.mxu0 0.0
        %290 = vmatprep.subr.mxu0 0.0
        %291 = vmatpush1.msra.mxu0 0.0
        %292 = vmatprep.subr.mxu0 0.0
        %293 = vmatpush1.msra.mxu0 0.0
        %294 = vmatprep.subr.mxu0 0.0
        %295 = vmatpush1.msra.mxu0 0.0
        %296 = vmatprep.subr.mxu0 0.0
        %297 = vmatpush1.msra.mxu0 0.0
        %298 = vmatprep.subr.mxu0 0.0
        %299 = vmatpush1.msra.mxu0 0.0
        %300 = vmatprep.subr.mxu0 0.0
        %301 = vmatpush1.msra.mxu0 0.0
        %302 = vmatprep.subr.mxu0 0.0
        %303 = vmatpush1.msra.mxu0 0.0
        %304 = vmatprep.subr.mxu0 0.0
        %305 = vmatpush1.msra.mxu0 0.0
        %306 = vmatprep.subr.mxu0 0.0
        %307 = vmatpush1.msra.mxu0 0.0
        %308 = vmatprep.subr.mxu0 0.0
        %309 = vmatpush1.msra.mxu0 0.0
        %310 = vmatprep.subr.mxu0 0.0
        %311 = vmatpush1.msra.mxu0 0.0
        %312 = vmatprep.subr.mxu0 0.0
        %313 = vmatpush1.msra.mxu0 0.0
        %314 = vmatprep.subr.mxu0 0.0
        %315 = vmatpush1.msra.mxu0 0.0
        %316 = vmatprep.subr.mxu0 0.0
        %317 = vmatpush1.msra.mxu0 0.0
        %318 = vmatprep.subr.mxu0 0.0
        %319 = vmatpush1.msra.mxu0 0.0
        %320 = vmatprep.subr.mxu0 0.0
        %321 = vmatpush1.msra.mxu0 0.0
        %322 = vmatprep.subr.mxu0 0.0
        %323 = vmatpush1.msra.mxu0 0.0
        %324 = vmatprep.subr.mxu0 0.0
        %325 = vmatpush1.msra.mxu0 0.0
        %326 = vmatprep.subr.mxu0 0.0
        %327 = vmatpush1.msra.mxu0 0.0
        %328 = vmatprep.subr.mxu0 0.0
        %329 = vmatpush1.msra.mxu0 0.0
        %330 = vmatprep.mubr.f32.mxu0 0.0
        %331 = vmatmul.mubr.f32.gmra.mrb[0].mxu0 %v264
        %v332 = vpop.f32.mrb[0].mxu0
        %v333 = vadd.f32 0.0, %v332
        %v334 = vpop.f32.mrb[0].mxu0
        %335 = vdwg.mxu0
        %v336 = vld [vmem:[%s256] sm:$0xff]
        %v337 = vld [vmem:[%s256 + $0x8] sm:$0xff]
        %v338 = vld [vmem:[%s256 + $0x10] sm:$0xff]
        %v339 = vld [vmem:[%s256 + $0x18] sm:$0xff]
        %340 = vmatprep.subr.mxu0 0.0
        %341 = vmatpush1.msra.mxu0 %v336
        %342 = vmatprep.subr.mxu0 0.0
        %343 = vmatpush1.msra.mxu0 %v337
        %344 = vmatprep.subr.mxu0 0.0
        %345 = vmatpush1.msra.mxu0 %v338
        %346 = vmatprep.subr.mxu0 0.0
        %347 = vmatpush1.msra.mxu0 %v339
        %348 = vmatprep.subr.mxu0 0.0
        %349 = vmatpush1.msra.mxu0 0.0
        %350 = vmatprep.subr.mxu0 0.0
        %351 = vmatpush1.msra.mxu0 0.0
        %352 = vmatprep.subr.mxu0 0.0
        %353 = vmatpush1.msra.mxu0 0.0
        %354 = vmatprep.subr.mxu0 0.0
        %355 = vmatpush1.msra.mxu0 0.0
        %356 = vmatprep.subr.mxu0 0.0
        %357 = vmatpush1.msra.mxu0 0.0
        %358 = vmatprep.subr.mxu0 0.0
        %359 = vmatpush1.msra.mxu0 0.0
        %360 = vmatprep.subr.mxu0 0.0
        %361 = vmatpush1.msra.mxu0 0.0
        %362 = vmatprep.subr.mxu0 0.0
        %363 = vmatpush1.msra.mxu0 0.0
        %364 = vmatprep.subr.mxu0 0.0
        %365 = vmatpush1.msra.mxu0 0.0
        %366 = vmatprep.subr.mxu0 0.0
        %367 = vmatpush1.msra.mxu0 0.0
        %368 = vmatprep.subr.mxu0 0.0
        %369 = vmatpush1.msra.mxu0 0.0
        %370 = vmatprep.subr.mxu0 0.0
        %371 = vmatpush1.msra.mxu0 0.0
        %372 = vmatprep.subr.mxu0 0.0
        %373 = vmatpush1.msra.mxu0 0.0
        %374 = vmatprep.subr.mxu0 0.0
        %375 = vmatpush1.msra.mxu0 0.0
        %376 = vmatprep.subr.mxu0 0.0
        %377 = vmatpush1.msra.mxu0 0.0
        %378 = vmatprep.subr.mxu0 0.0
        %379 = vmatpush1.msra.mxu0 0.0
        %380 = vmatprep.subr.mxu0 0.0
        %381 = vmatpush1.msra.mxu0 0.0
        %382 = vmatprep.subr.mxu0 0.0
        %383 = vmatpush1.msra.mxu0 0.0
        %384 = vmatprep.subr.mxu0 0.0
        %385 = vmatpush1.msra.mxu0 0.0
        %386 = vmatprep.subr.mxu0 0.0
        %387 = vmatpush1.msra.mxu0 0.0
        %388 = vmatprep.subr.mxu0 0.0
        %389 = vmatpush1.msra.mxu0 0.0
        %390 = vmatprep.subr.mxu0 0.0
        %391 = vmatpush1.msra.mxu0 0.0
        %392 = vmatprep.subr.mxu0 0.0
        %393 = vmatpush1.msra.mxu0 0.0
        %394 = vmatprep.subr.mxu0 0.0
        %395 = vmatpush1.msra.mxu0 0.0
        %396 = vmatprep.subr.mxu0 0.0
        %397 = vmatpush1.msra.mxu0 0.0
        %398 = vmatprep.subr.mxu0 0.0
        %399 = vmatpush1.msra.mxu0 0.0
        %400 = vmatprep.subr.mxu0 0.0
        %401 = vmatpush1.msra.mxu0 0.0
        %402 = vmatprep.subr.mxu0 0.0
        %403 = vmatpush1.msra.mxu0 0.0
        %404 = vmatprep.mubr.f32.mxu0 0.0
        %405 = vmatmul.mubr.f32.gmra.mrb[0].mxu0 %v264
        %v406 = vpop.f32.mrb[0].mxu0
        %v407 = vadd.f32 0.0, %v406
        %v408 = vpop.f32.mrb[0].mxu0
        %409 = vdwg.mxu0
        %411 = vrot.lane.b32.xlu0 %v333, 1
        %v412 = vpop.permute.xlu0 %411
        %vm414 = vcmask 7168
        %v415 = vsel %vm414, %v407, %v412
        %v417 = vrot.slane %v415, 2
        %v419 = vadd.f32 %v333, %v417
        %v420 = vld [vmem:[#allocation2] sm:$0x1]
        %v422 = vlaneseq
        %v423 = vshrl.u32 %v422, 7
        %v424 = vsub.s32 0, %v423
        %v425 = vrot.slane %v420, %v424
        %426 = vset.pattern.permute.xlu0 0
        %427 = vperm.xlu0 %426, %v425
        %v428 = vpop.permute.xlu0 %427
        %v430 = vadd.f32 %v419, %v428
        %431 = vst [vmem:[%s239] sm:$0x3] %v430
        %s432 = sand.u32 %s140, 1
        %s433 = scalar_lea.sflag [#allocation4], %s432
        %s434 = sand.u32 %s140, 1
        %s435 = smul.addr %s434, 2
        %s436 = scalar_lea.vmem [#allocation3], %s435
        // Predicated region
        $region37: #{tpu_custom_call.1} parent=35 // pred_check
          %p437 = pneg %p150
        $region38: #{tpu_custom_call.1} parent=35 // pred_check_branch
          %439 = sbr.rel (%p437) target = $region40
        $region39: #{tpu_custom_call.1} parent=35 // pred_region
          %s441 = ssub.s32 32, 32
          %442 = vsyncadd %s433, %s441
          %s443 = sadd.s32 %s25, %s24
          %s444 = smul.addr %s443, 32
          %s445 = scalar_lea.hbm %s4, %s444
          %s447 = sshll.u32 %s436, 4
          %s448 = int_to_ptr.vmem [resolvable:$true] %s447
          %450 = dma.vmem_to_hbm [thread:$0]  %s448, 32, %s445, %s433
        $region40: #{tpu_custom_call.1} parent=35 // pred_fallthru
          _
      $region36: #{tpu_custom_call.1} parent=5 // pred_fallthru
        _
      %p451 = scmp.le.s32.totalorder 2, %s15
      // Predicated region
      $region41: #{tpu_custom_call.1} parent=5 // pred_check
        %p452 = pneg %p451
      $region42: #{tpu_custom_call.1} parent=5 // pred_check_branch
        %454 = sbr.rel (%p452) target = $region44
      $region43: #{tpu_custom_call.1} parent=5 // pred_region
        %s455 = ssub.s32 %s15, 2
        // Predicated region
        $region45: #{tpu_custom_call.1} parent=43 // pred_check
          %p456 = pneg %p156
        $region46: #{tpu_custom_call.1} parent=43 // pred_check_branch
          %458 = sbr.rel (%p456) target = $region48
        $region47: #{tpu_custom_call.1} parent=43 // pred_region
          %s459 = sand.u32 %s141, 1
          %s460 = scalar_lea.sflag [#allocation4], %s459
          %s461 = sand.u32 %s141, 1
          %s462 = smul.addr %s461, 2
          %s463 = scalar_lea.vmem [#allocation3], %s462
          %464 = dma.done %s460, 32
        $region48: #{tpu_custom_call.1} parent=43 // pred_fallthru
          _
      $region44: #{tpu_custom_call.1} parent=5 // pred_fallthru
        _
    $region6: #{tpu_custom_call.1} parent=1 // loop_footer
      %s19 = sadd.s32 1, %s15
    $region7: #{tpu_custom_call.1} parent=1 // loop_footer_branch
      %14 = sbr.rel target = $region3
    $region8: #{tpu_custom_call.1} parent=1 // loop_exit
      _
    %465 = vsyncpa [#allocation4], 1
    %s466 = scalar_lea.sflag [#allocation4], 1
    %467 = vsyncpa %s466, 1

</llo_original>
